<compile_context>
chip_gen: v5e
topology: v5e:2x2
jax: 0.10.0
libtpu: 0.0.40
codegen_flags: <defaults>
</compile_context>

<pallas_src>
import functools
import math

import numpy as np
import jax
import jax.numpy as jnp
from jax.experimental import pallas as pl
from jax.experimental.pallas import tpu as pltpu


# --------------------------------------------------------------------------------------
# Host-side helpers
# --------------------------------------------------------------------------------------
def _round_up(x, m):
    return ((x + m - 1) // m) * m


def _col_selector_np(W, W_out):
    iw = (np.arange(W_out) * W) // W_out
    R = np.zeros((W, W_out), dtype=np.float32)
    R[iw, np.arange(W_out)] = 1.0
    return R


def _row_selector_np(H, H_out):
    ih = (np.arange(H_out) * H) // H_out
    L = np.zeros((H_out, H), dtype=np.float32)
    L[np.arange(H_out), ih] = 1.0
    return L


def _compute_dtype(dtype):
    """Matmul dtype: bf16 when exact & fast (quantized / bf16 data), f32 otherwise."""
    d = jnp.dtype(dtype)
    if d == jnp.dtype(jnp.bfloat16):
        return jnp.bfloat16
    if jnp.issubdtype(d, jnp.integer) and d.itemsize == 1:
        # quint8/int8: values 0..255 are exact in bf16.  bf16 (not int8) so v7x (no int MXU)
        # and v5e/v6e all take the same fast path.
        # TODO(synk): an int8-selector / int32-accumulate path would be slightly faster on v5e/v6e.
        return jnp.bfloat16
    return jnp.float32   # arbitrary f32 activations stay bit-exact


def _vmem_budget():
    """(accounted byte budget per grid step, vmem_limit_bytes) scaled to the chip's VMEM."""
    try:
        cap = int(pltpu.get_tpu_info().vmem_capacity_bytes)
    except Exception:
        cap = 64 * 1024 * 1024          # conservative (v7x per-TC) fallback
    limit = min(cap // 2, 64 * 1024 * 1024)   # v5e/v6e -> 64 MiB, v7x -> 32 MiB
    budget = (limit * 3) // 4                 # headroom below the requested scoped limit
    return budget, limit


def _choose_rows(total_rows, w_in, w_out2, in_item, out_item, cdt_item, budget):
    """Row-block size for the flat 2-D fast path, padded-VMEM aware."""
    wp = _round_up(w_in, 128)
    op = _round_up(w_out2, 128)
    per_row = (2 * wp * in_item          # input block, double buffered
               + 2 * op * out_item       # output block, double buffered
               + wp * cdt_item           # in-kernel cast of x
               + op * 4                  # f32 matmul result
               + op * out_item)          # cast back to the output dtype
    sel = 2 * _round_up(w_in, 8) * op * cdt_item     # resident selector (double buffered)
    r = max(8, (budget - sel) // max(per_row, 1))
    r = min(r, max(8, pl.cdiv(total_rows, 4)))       # keep >=4 grid steps when possible
    r = min(r, total_rows)
    if r >= 256:
        r = (r // 256) * 256            # large blocks: dense DMAs, any dtype packing
    elif r >= 32:
        r = (r // 32) * 32              # covers f32/bf16/int8 sublane packing
    elif r >= 8:
        r = (r // 8) * 8
    return max(1, r)


def _choose_planes(n_planes, H, W, H_out, W_out, in_item, out_item, cdt_item, budget):
    """Plane-block size for the general (fractional-H) path, padded-VMEM aware."""
    hp, hop = _round_up(H, 8), _round_up(H_out, 8)
    wp, wop = _round_up(W, 128), _round_up(W_out, 128)
    hl = _round_up(H, 128)
    per_plane = (2 * hp * wp * in_item           # input block, double buffered
                 + 2 * hop * wop * out_item      # output block, double buffered
                 + hp * wp * cdt_item            # x cast
                 + hp * wop * (4 + cdt_item)     # W-upsampled temp (f32 + compute-dtype copy)
                 + hop * wop * (4 + out_item)    # H-upsampled f32 + cast back
                 + hop * hl * cdt_item)          # broadcast row selector (per plane)
    sel = 2 * (_round_up(W, 8) * wop + hop * hl) * cdt_item   # resident R and L
    tb = max(1, (budget - sel) // max(per_plane, 1))
    tb = min(tb, max(1, pl.cdiv(n_planes, 4)))   # keep >=4 grid steps when possible
    return max(1, min(tb, n_planes))


def _resolve_out_size(H, W, size, scale_factor):
    if size is not None:
        if isinstance(size, int):
            return size, size
        return int(size[0]), int(size[1])
    if isinstance(scale_factor, (int, float)):
        sh = sw = scale_factor
    else:
        sh, sw = scale_factor
    return int(math.floor(H * sh)), int(math.floor(W * sw))


# --------------------------------------------------------------------------------------
# Kernels
# --------------------------------------------------------------------------------------
def _upsample_rows_kernel(x_ref, r2_ref, o_ref, *, cdt):
    # x_ref: (ROWS, W); r2_ref: (W, sh*W_out) 0/1 selector with the vertical replication folded in.
    x = x_ref[...].astype(cdt)
    y = jnp.dot(x, r2_ref[...], preferred_element_type=jnp.float32)
    o_ref[...] = y.astype(o_ref.dtype)


def _upsample_general_kernel(x_ref, r_ref, l_ref, o_ref, *, TB, H, W, H_out, W_out, cdt):
    # W-upsample: one flat 2-D matmul with the resident column selector.
    x = x_ref[...].reshape(TB * H, W).astype(cdt)
    tmp = jnp.dot(x, r_ref[...], preferred_element_type=jnp.float32)        # (TB*H, W_out)
    tmp = tmp.reshape(TB, H, W_out).astype(cdt)
    # H-upsample: batched 0/1 row-selection matmul (small K=H; kept because it lowers on all chips).
    # TODO(synk): replace with a zero-FLOP sublane gather / index_map row selection, and present a
    #             lane-dense (>=128-multiple) output slab when W_out is small.
    lb = jnp.broadcast_to(l_ref[...], (TB, H_out, H))
    out = jnp.einsum('boh,bhw->bow', lb, tmp, preferred_element_type=jnp.float32)
    o_ref[...] = out.astype(o_ref.dtype)


# --------------------------------------------------------------------------------------
# Wrapper (forward of QuantizeUpSample)
# --------------------------------------------------------------------------------------
def quantize_upsample(x, size=None, scale_factor=None):
    """Nearest-neighbor upsample of an NCHW tensor (forward of QuantizeUpSample)."""
    if size is None and scale_factor is None:
        raise ValueError("either size or scale_factor must be given")

    N, C, H, W = x.shape
    H_out, W_out = _resolve_out_size(H, W, size, scale_factor)
    NC = N * C

    cdt = _compute_dtype(x.dtype)
    in_item = jnp.dtype(x.dtype).itemsize
    out_item = in_item
    cdt_item = jnp.dtype(cdt).itemsize
    budget, vmem_limit = _vmem_budget()

    if H_out % H == 0:
        # ---- fast path: integer vertical scale -> single flat 2-D matmul per block ----
        sh = H_out // H
        WO2 = sh * W_out
        R2 = jnp.asarray(np.tile(_col_selector_np(W, W_out), (1, sh)), dtype=cdt)   # (W, sh*W_out)

        rows = NC * H
        x2 = x.reshape(rows, W)
        ROWS = _choose_rows(rows, W, WO2, in_item, out_item, cdt_item, budget)
        grid = (pl.cdiv(rows, ROWS),)

        kernel = functools.partial(_upsample_rows_kernel, cdt=cdt)
        out = pl.pallas_call(
            kernel,
            out_shape=jax.ShapeDtypeStruct((rows, WO2), x.dtype),
            grid_spec=pltpu.PrefetchScalarGridSpec(
                num_scalar_prefetch=0,
                grid=grid,
                in_specs=[
                    pl.BlockSpec((ROWS, W), lambda i: (i, 0)),
                    pl.BlockSpec((W, WO2), lambda i: (0, 0)),     # resident selector (DMA'd once)
                ],
                out_specs=pl.BlockSpec((ROWS, WO2), lambda i: (i, 0)),
            ),
            compiler_params=pltpu.CompilerParams(
                dimension_semantics=("parallel",),
                vmem_limit_bytes=vmem_limit,
            ),
        )(x2, R2)
        # (NC*H, sh*W_out) and (N, C, H*sh, W_out) share the same flat layout -> free reshape.
        return out.reshape(N, C, H_out, W_out)

    # ---- general path: fractional vertical ratio ----
    R = jnp.asarray(_col_selector_np(W, W_out), dtype=cdt)     # (W, W_out)
    L = jnp.asarray(_row_selector_np(H, H_out), dtype=cdt)     # (H_out, H)
    xf = x.reshape(NC, H, W)
    TB = _choose_planes(NC, H, W, H_out, W_out, in_item, out_item, cdt_item, budget)
    grid = (pl.cdiv(NC, TB),)

    kernel = functools.partial(_upsample_general_kernel, TB=TB, H=H, W=W,
                               H_out=H_out, W_out=W_out, cdt=cdt)
    out = pl.pallas_call(
        kernel,
        out_shape=jax.ShapeDtypeStruct((NC, H_out, W_out), x.dtype),
        grid_spec=pltpu.PrefetchScalarGridSpec(
            num_scalar_prefetch=0,
            grid=grid,
            in_specs=[
                pl.BlockSpec((TB, H, W), lambda i: (i, 0, 0)),
                pl.BlockSpec((W, W_out), lambda i: (0, 0)),      # resident
                pl.BlockSpec((H_out, H), lambda i: (0, 0)),      # resident
            ],
            out_specs=pl.BlockSpec((TB, H_out, W_out), lambda i: (i, 0, 0)),
        ),
        compiler_params=pltpu.CompilerParams(
            dimension_semantics=("parallel",),
            vmem_limit_bytes=vmem_limit,
        ),
    )(xf, R, L)
    return out.reshape(N, C, H_out, W_out)


# --------------------------------------------------------------------------------------
if __name__ == "__main__":
    key = jax.random.PRNGKey(0)
    x = jax.random.normal(key, (2, 4, 16, 16), dtype=jnp.float32)

    # Fast path (integer scale), f32 input -> exact f32 selector matmul.
    y = quantize_upsample(x, scale_factor=2)
    y = jax.block_until_ready(y)
    ref = jnp.repeat(jnp.repeat(x, 2, axis=2), 2, axis=3)
    assert y.shape == (2, 4, 32, 32), y.shape
    assert jnp.allclose(y, ref), "mismatch vs 2x nearest reference (f32 fast path)"

    # Fast path, bf16 input -> bf16 MXU selector matmul (exact for 0/1 selectors).
    xb = x.astype(jnp.bfloat16)
    yb = quantize_upsample(xb, scale_factor=2)
    yb = jax.block_until_ready(yb)
    refb = jnp.repeat(jnp.repeat(xb, 2, axis=2), 2, axis=3)
    assert yb.dtype == jnp.bfloat16, yb.dtype
    assert jnp.array_equal(yb, refb), "mismatch vs 2x nearest reference (bf16 fast path)"

    # Explicit output size with a non-integer height ratio (general path).
    y2 = quantize_upsample(x, size=(24, 40))
    y2 = jax.block_until_ready(y2)
    ridx = (jnp.arange(24) * 16) // 24
    cidx = (jnp.arange(40) * 16) // 40
    ref2 = x[:, :, ridx, :][:, :, :, cidx]
    assert y2.shape == (2, 4, 24, 40), y2.shape
    assert jnp.allclose(y2, ref2), "mismatch vs nearest reference (size path)"

    print("KERNEL_OK")
</pallas_src>

<mosaic_0001>
module attributes {stable_mosaic.version = 11 : i64} {
  func.func @_upsample_rows_kernel(%arg0: i32, %arg1: memref<32x16xf32, #tpu.memory_space<vmem>>, %arg2: memref<16x64xf32, #tpu.memory_space<vmem>>, %arg3: memref<32x64xf32, #tpu.memory_space<vmem>>) attributes {dimension_semantics = [#tpu.dimension_semantics<parallel>], iteration_bounds = array<i64: 4>, scalar_prefetch = 0 : i64, scratch_operands = 0 : i64, tpu.core_type = #tpu.core_type<tc>, window_params = [{transform_indices = @transform_0, window_bounds = array<i64: 32, 16>}, {pipeline_mode = #tpu.pipeline_mode<synchronous>, transform_indices = @transform_1, window_bounds = array<i64: 16, 64>}, {transform_indices = @transform_2, window_bounds = array<i64: 32, 64>}]} {
    %c0 = arith.constant 0 : index
    %c0_0 = arith.constant 0 : index
    %0 = vector.load %arg1[%c0, %c0_0] : memref<32x16xf32, #tpu.memory_space<vmem>>, vector<32x16xf32>
    %c0_1 = arith.constant 0 : index
    %c0_2 = arith.constant 0 : index
    %1 = vector.load %arg2[%c0_1, %c0_2] : memref<16x64xf32, #tpu.memory_space<vmem>>, vector<16x64xf32>
    %cst = arith.constant dense<0.000000e+00> : vector<32x64xf32>
    %2 = tpu.matmul %0, %1, %cst {dimension_numbers = #tpu.dot_dimension_numbers<[1], [0], [0], [1], [0, 0, 1, 1], [], []>} : vector<32x16xf32>, vector<16x64xf32>, vector<32x64xf32> -> vector<32x64xf32>
    %c0_3 = arith.constant 0 : index
    %c0_4 = arith.constant 0 : index
    %3 = vector.load %arg3[%c0_3, %c0_4] : memref<32x64xf32, #tpu.memory_space<vmem>>, vector<32x64xf32>
    tpu.vector_store %arg3[%c0_3, %c0_4], %2 {strides = array<i32>} : memref<32x64xf32, #tpu.memory_space<vmem>>, vector<32x64xf32>,
    return
  }
  func.func @transform_0(%arg0: i32) -> (i32, i32) {
    %c0_i32 = arith.constant 0 : i32
    %c0_i32_0 = arith.constant 0 : i32
    return %arg0, %c0_i32 : i32, i32
  }
  func.func @transform_1(%arg0: i32) -> (i32, i32) {
    %c0_i32 = arith.constant 0 : i32
    %c0_i32_0 = arith.constant 0 : i32
    %c0_i32_1 = arith.constant 0 : i32
    return %c0_i32, %c0_i32_0 : i32, i32
  }
  func.func @transform_2(%arg0: i32) -> (i32, i32) {
    %c0_i32 = arith.constant 0 : i32
    %c0_i32_0 = arith.constant 0 : i32
    return %arg0, %c0_i32 : i32, i32
  }
}

</mosaic_0001>

<llo_original>
// kernel: tpu_custom_call.1
$region0: #{tpu_custom_call.1}
  #allocation0 [shape = 'u32[]', space=smem, size = 0x4, offset = 0x4, fixed_abs, tag = 'smem constant byte address 0x4 - core index']
  #allocation1 [shape = 'u32[72,128]{1,0:T(1,128)}', space=vmem, size = 0x9000, scoped, tag = 'internal scratch']
  %s0 = inlined_call_operand.vmem [shape: f32[128,16], index: 0, kind: input, shape index: {}]
  %s1 = inlined_call_operand.vmem [shape: f32[16,64], index: 1, kind: input, shape index: {}]
  %s2 = inlined_call_operand.vmem [shape: f32[128,64], index: 2, kind: output, shape index: {}]
  %s3 = sld [smem:[#allocation0]]
  $region41: #{tpu_custom_call.1} parent=0
    _
  %s5 = ssub.s32 1, %s3
  %s6 = scalar_select 0, %s5, %s3
  loop: start=0, step=1, limit=6
  $region2: #{tpu_custom_call.1} parent=0 // loop_pre_header
    _
  $region3: #{tpu_custom_call.1} parent=0 // loop_header
    %s8 = sphi 0, %s12
    %p9 = scmp.ge.s32.totalorder %s8, 6
    %s18 = sphi 0, %s20
    %s21 = sphi 0, %s18
    %s22 = sphi 0, %s21
    %s38 = sphi 0, %s22
    %s42 = sphi 0, %s42
    %s44 = sphi 0, %s42
    %s45 = sphi 0, %s44
    %s59 = sphi 0, %s45
    %s65 = sphi 0, %s67
    %s68 = sphi 0, %s65
    %s69 = sphi 0, %s68
    %s85 = sphi 0, %s69
  $region4: #{tpu_custom_call.1} parent=0 // loop_header_branch
    %11 = sbr.rel (%p9) target = $region8
  $region5: #{tpu_custom_call.1} parent=0 // loop_body
    %s13 = ssub.s32 %s8, 1
    %s14 = ssub.s32 %s8, 2
    %s15 = sadd.s32 %s8, 1
    %s16 = ssub.s32 %s8, %s15
    %p17 = scmp.eq.s32.totalorder %s16, 0
    %s19 = sadd.s32 %s18, 1
    %s20 = scalar_select %p17, %s18, %s19
    %p23 = pneg %p17
    %p24 = scmp.eq.s32.totalorder %s8, 3
    %p25 = por %p23, %p24
    %p26 = scmp.ne.s32.totalorder %s18, %s21
    %p27 = scmp.eq.s32.totalorder %s8, 0
    %p28 = por %p26, %p27
    %p29 = scmp.ne.s32.totalorder %s18, %s21
    %p30 = scmp.eq.s32.totalorder %s13, 3
    %p31 = por %p29, %p30
    %p32 = scmp.ne.s32.totalorder %s21, %s22
    %p33 = scmp.eq.s32.totalorder %s13, 0
    %p34 = por %p32, %p33
    %p35 = scmp.ne.s32.totalorder %s21, %s22
    %p36 = scmp.eq.s32.totalorder %s14, 3
    %p37 = por %p35, %p36
    %p39 = scmp.ne.s32.totalorder %s22, %s38
    %p40 = scmp.eq.s32.totalorder %s14, 0
    %p41 = por %p39, %p40
    %s43 = sadd.s32 %s42, 1
    %p46 = scmp.eq.s32.totalorder %s8, 3
    %p47 = scmp.ne.s32.totalorder %s42, %s44
    %p48 = scmp.eq.s32.totalorder %s8, 0
    %p49 = por %p47, %p48
    %p50 = scmp.ne.s32.totalorder %s42, %s44
    %p51 = scmp.eq.s32.totalorder %s13, 3
    %p52 = por %p50, %p51
    %p53 = scmp.ne.s32.totalorder %s44, %s45
    %p54 = scmp.eq.s32.totalorder %s13, 0
    %p55 = por %p53, %p54
    %p56 = scmp.ne.s32.totalorder %s44, %s45
    %p57 = scmp.eq.s32.totalorder %s14, 3
    %p58 = por %p56, %p57
    %p60 = scmp.ne.s32.totalorder %s45, %s59
    %p61 = scmp.eq.s32.totalorder %s14, 0
    %p62 = por %p60, %p61
    %s63 = ssub.s32 %s8, %s15
    %p64 = scmp.eq.s32.totalorder %s63, 0
    %s66 = sadd.s32 %s65, 1
    %s67 = scalar_select %p64, %s65, %s66
    %p70 = pneg %p64
    %p71 = scmp.eq.s32.totalorder %s8, 3
    %p72 = por %p70, %p71
    %p73 = scmp.ne.s32.totalorder %s65, %s68
    %p74 = scmp.eq.s32.totalorder %s8, 0
    %p75 = por %p73, %p74
    %p76 = scmp.ne.s32.totalorder %s65, %s68
    %p77 = scmp.eq.s32.totalorder %s13, 3
    %p78 = por %p76, %p77
    %p79 = scmp.ne.s32.totalorder %s68, %s69
    %p80 = scmp.eq.s32.totalorder %s13, 0
    %p81 = por %p79, %p80
    %p82 = scmp.ne.s32.totalorder %s68, %s69
    %p83 = scmp.eq.s32.totalorder %s14, 3
    %p84 = por %p82, %p83
    %p86 = scmp.ne.s32.totalorder %s69, %s85
    %p87 = scmp.eq.s32.totalorder %s14, 0
    %p88 = por %p86, %p87
    %p89 = scmp.le.s32.totalorder 1, %s8
    %p90 = scmp.lt.s32.totalorder %s8, 5
    %p91 = pnand %p89, %p90
    %p92 = pneg %p91
    // Predicated region
    $region9: #{tpu_custom_call.1} parent=5 // pred_check
      _
    $region10: #{tpu_custom_call.1} parent=5 // pred_check_branch
      %94 = sbr.rel (%p91) target = $region12
    $region11: #{tpu_custom_call.1} parent=5 // pred_region
      %s95 = ssub.s32 %s8, 1
      // Predicated region
      $region13: #{tpu_custom_call.1} parent=11 // pred_check
        %p96 = pneg %p55
      $region14: #{tpu_custom_call.1} parent=11 // pred_check_branch
        %98 = sbr.rel (%p96) target = $region16
      $region15: #{tpu_custom_call.1} parent=11 // pred_region
        _
      $region16: #{tpu_custom_call.1} parent=11 // pred_fallthru
        _
    $region12: #{tpu_custom_call.1} parent=5 // pred_fallthru
      _
    %p99 = scmp.lt.s32.totalorder %s8, 4
    // Predicated region
    $region17: #{tpu_custom_call.1} parent=5 // pred_check
      %p100 = pneg %p99
    $region18: #{tpu_custom_call.1} parent=5 // pred_check_branch
      %102 = sbr.rel (%p100) target = $region20
    $region19: #{tpu_custom_call.1} parent=5 // pred_region
      // Predicated region
      $region21: #{tpu_custom_call.1} parent=19 // pred_check
        %p103 = pneg %p28
      $region22: #{tpu_custom_call.1} parent=19 // pred_check_branch
        %105 = sbr.rel (%p103) target = $region24
      $region23: #{tpu_custom_call.1} parent=19 // pred_region
        %s106 = smul.u32 4, %s8
        %p107 = scmp.lt.s32.totalorder %s106, 15
        %s108 = scalar_select %p107, %s106, 15
        %s109 = smul.addr %s108, 8
        %s110 = scalar_lea.vmem %s0, %s109
        %s111 = smul.u32 4, %s8
      $region24: #{tpu_custom_call.1} parent=19 // pred_fallthru
        _
    $region20: #{tpu_custom_call.1} parent=5 // pred_fallthru
      _
    %p112 = scmp.le.s32.totalorder 1, %s8
    %p113 = scmp.lt.s32.totalorder %s8, 5
    %p114 = pnand %p112, %p113
    %p115 = pneg %p114
    // Predicated region
    $region25: #{tpu_custom_call.1} parent=5 // pred_check
      _
    $region26: #{tpu_custom_call.1} parent=5 // pred_check_branch
      %117 = sbr.rel (%p114) target = $region28
    $region27: #{tpu_custom_call.1} parent=5 // pred_region
      %s118 = ssub.s32 %s8, 1
      %s119 = smul.u32 4, %s13
      %p120 = scmp.lt.s32.totalorder %s119, 15
      %s121 = scalar_select %p120, %s119, 15
      %s122 = smul.addr %s121, 8
      %s123 = scalar_lea.vmem %s0, %s122
      %p124 = pneg %p34
      %p125 = pneg %p31
      %p126 = pneg %p55
      %p127 = pneg %p52
      %p128 = pneg %p81
      %p129 = pneg %p78
      %s130 = smul.u32 4, %s13
      %p131 = scmp.lt.s32.totalorder %s130, 15
      %s132 = scalar_select %p131, %s130, 15
      %s133 = smul.addr %s132, 8
      %s134 = scalar_lea.vmem %s2, %s133
      %s135 = smul.u32 4, %s13
      %p136 = scmp.lt.s32.totalorder %s135, 15
      %s137 = scalar_select %p136, %s135, 15
      %s138 = smul.addr %s137, 8
      %s139 = scalar_lea.vmem %s0, %s138
      %s140 = smul.u32 4, %s13
      %s141 = smul.u32 4, %s13
      %p142 = scmp.lt.s32.totalorder %s141, 15
      %s143 = scalar_select %p142, %s141, 15
      %s144 = smul.addr %s143, 8
      %s145 = scalar_lea.vmem %s2, %s144
      %s146 = smul.u32 4, %s13
      %v147 = vld [vmem:[%s139] sm:$0xff]
      %v148 = vld [vmem:[%s139 + $0x8] sm:$0xff]
      %v149 = vld [vmem:[%s139 + $0x10] sm:$0xff]
      %v150 = vld [vmem:[%s139 + $0x18] sm:$0xff]
      %v151 = vld [vmem:[%s1] sm:$0xff]
      %v152 = vld [vmem:[%s1 + $0x8] sm:$0xff]
      %vm153 = vcmask 130048
      %v155 = vsel %vm153, %v147, 0
      %v158 = vsel %vm153, %v148, 0
      %v161 = vsel %vm153, %v149, 0
      %v164 = vsel %vm153, %v150, 0
      %166 = vmatpush.msra.mxu0 0.0
      %167 = vmatpush.msra.mxu0 0.0
      %168 = vmatpush.msra.mxu0 0.0
      %169 = vmatpush.msra.mxu0 0.0
      %170 = vmatpush.msra.mxu0 0.0
      %171 = vmatpush.msra.mxu0 0.0
      %172 = vmatpush.msra.mxu0 0.0
      %173 = vmatpush.msra.mxu0 0.0
      %174 = vmatpush.msra.mxu0 0.0
      %175 = vmatpush.msra.mxu0 0.0
      %176 = vmatpush.msra.mxu0 0.0
      %177 = vmatpush.msra.mxu0 0.0
      %178 = vmatpush.msra.mxu0 0.0
      %179 = vmatpush.msra.mxu0 0.0
      %180 = vmatpush.msra.mxu0 %v152
      %181 = vmatpush.msra.mxu0 %v151
      %182 = vmatmul.f32.gmra.mxu0 %v155
      %v183 = vpop.f32.mrf.mxu0
      %v184 = vadd.f32 0.0, %v183
      %185 = vmatmul.f32.gmra.mxu0 %v158
      %v186 = vpop.f32.mrf.mxu0
      %v187 = vadd.f32 0.0, %v186
      %188 = vmatmul.f32.gmra.mxu0 %v161
      %v189 = vpop.f32.mrf.mxu0
      %v190 = vadd.f32 0.0, %v189
      %191 = vmatmul.f32.gmra.mxu0 %v164
      %v192 = vpop.f32.mrf.mxu0
      %v193 = vadd.f32 0.0, %v192
      %194 = vdwg.mxu0
      %vm195 = vcmask 523264
      %196 = vst.msk [vmem:[%s145] sm:$0xff] %vm195, %v184
      %197 = vst.msk [vmem:[%s145 + $0x8] sm:$0xff] %vm195, %v187
      %198 = vst.msk [vmem:[%s145 + $0x10] sm:$0xff] %vm195, %v190
      %199 = vst.msk [vmem:[%s145 + $0x18] sm:$0xff] %vm195, %v193
      %s200 = smul.u32 4, %s13
      %p201 = scmp.lt.s32.totalorder %s200, 15
      %s202 = scalar_select %p201, %s200, 15
      %s203 = smul.addr %s202, 8
      %s204 = scalar_lea.vmem %s2, %s203
      // Predicated region
      $region29: #{tpu_custom_call.1} parent=27 // pred_check
        %p205 = pneg %p78
      $region30: #{tpu_custom_call.1} parent=27 // pred_check_branch
        %207 = sbr.rel (%p205) target = $region32
      $region31: #{tpu_custom_call.1} parent=27 // pred_region
        %s208 = smul.u32 4, %s13
      $region32: #{tpu_custom_call.1} parent=27 // pred_fallthru
        _
    $region28: #{tpu_custom_call.1} parent=5 // pred_fallthru
      _
    %p209 = scmp.le.s32.totalorder 2, %s8
    // Predicated region
    $region33: #{tpu_custom_call.1} parent=5 // pred_check
      %p210 = pneg %p209
    $region34: #{tpu_custom_call.1} parent=5 // pred_check_branch
      %212 = sbr.rel (%p210) target = $region36
    $region35: #{tpu_custom_call.1} parent=5 // pred_region
      %s213 = ssub.s32 %s8, 2
      // Predicated region
      $region37: #{tpu_custom_call.1} parent=35 // pred_check
        %p214 = pneg %p84
      $region38: #{tpu_custom_call.1} parent=35 // pred_check_branch
        %216 = sbr.rel (%p214) target = $region40
      $region39: #{tpu_custom_call.1} parent=35 // pred_region
        %s217 = smul.u32 4, %s14
        %p218 = scmp.lt.s32.totalorder %s217, 15
        %s219 = scalar_select %p218, %s217, 15
        %s220 = smul.addr %s219, 8
        %s221 = scalar_lea.vmem %s2, %s220
      $region40: #{tpu_custom_call.1} parent=35 // pred_fallthru
        _
    $region36: #{tpu_custom_call.1} parent=5 // pred_fallthru
      _
  $region6: #{tpu_custom_call.1} parent=0 // loop_footer
    %s12 = sadd.s32 1, %s8
  $region7: #{tpu_custom_call.1} parent=0 // loop_footer_branch
    %7 = sbr.rel target = $region3
  $region8: #{tpu_custom_call.1} parent=0 // loop_exit
    _

</llo_original>
